<compile_context>
chip_gen: v6e
topology: v6e:2x2x1
jax: 0.10.0
libtpu: 0.0.40
codegen_flags: <defaults>
</compile_context>

<pallas_src>
import jax
import jax.numpy as jnp
from jax import lax
from jax.experimental import pallas as pl
from jax.experimental.pallas import tpu as pltpu

LANES = 128                # vreg lane width
CHUNK_ROWS = 128           # in-kernel compute chunk: (128,128) f32 = 16 vregs/array
MAX_BLOCK_ROWS = 8192      # (8192,128) f32 = 4 MiB per input per pipeline buffer
VMEM_LIMIT_BYTES = 32 * 1024 * 1024  # fits 2 inputs x 2 buffers x 4 MiB on all gens


def _weighted_loss_elems(p32, t32, beta, half_over_beta, half_beta, penalty):
    """Elementwise weighted SmoothL1 on f32 arrays (beta/penalty python floats)."""
    diff = p32 - t32
    ad = jnp.abs(diff)
    # torch SmoothL1(beta): quadratic for |d| < beta, linear otherwise.
    # beta == 0 degenerates to L1 (quadratic branch never selected).
    loss = jnp.where(ad < beta, ad * ad * half_over_beta, ad - half_beta)
    # Underprediction (pred < target  <=>  diff < 0) gets the higher penalty.
    w = jnp.where(diff < 0.0, jnp.float32(penalty), jnp.float32(1.0))
    return loss * w


def _to_partial_tile(contrib):
    """Reduce an (r, 128) f32 chunk to an (8, 128) partial-sum tile (VPU adds)."""
    r = contrib.shape[0]
    if r >= 8 and r % 8 == 0:
        acc = contrib[0:8, :]
        for k in range(1, r // 8):          # static slices = whole-vreg adds
            acc = acc + contrib[8 * k:8 * (k + 1), :]
        return acc
    # Tiny full-extent block (< 8 rows): scalar sum placed at element [0, 0].
    s = jnp.sum(contrib)
    rr = lax.broadcasted_iota(jnp.int32, (8, LANES), 0)
    cc = lax.broadcasted_iota(jnp.int32, (8, LANES), 1)
    return jnp.where((rr == 0) & (cc == 0), s, jnp.float32(0.0))


def _make_kernel(beta, penalty, block_rows, chunk_rows, valid_rows, grid0):
    beta = float(beta)
    penalty = float(penalty)
    half_over_beta = (0.5 / beta) if beta > 0.0 else 0.0   # beta==0 -> pure L1
    half_beta = 0.5 * beta
    nchunks = block_rows // chunk_rows
    needs_mask = (valid_rows % block_rows) != 0
    last_block_start = (grid0 - 1) * block_rows

    def compute_chunk(p_raw, t_raw, global_row0):
        p = p_raw.astype(jnp.float32)
        t = t_raw.astype(jnp.float32)
        contrib = _weighted_loss_elems(p, t, beta, half_over_beta, half_beta,
                                       penalty)
        if global_row0 is not None:
            # Rows at/after `valid_rows` hold unspecified VMEM contents; the
            # select discards them (NaN/Inf-safe).
            rid = lax.broadcasted_iota(jnp.int32, contrib.shape, 0)
            contrib = jnp.where(global_row0 + rid < valid_rows, contrib,
                                jnp.float32(0.0))
        return _to_partial_tile(contrib)

    def block_partial(pred_ref, targ_ref, masked):
        if nchunks == 1:
            return compute_chunk(pred_ref[...], targ_ref[...],
                                 last_block_start if masked else None)

        def body(c, acc):
            r0 = pl.multiple_of(c * chunk_rows, chunk_rows)
            row0 = (last_block_start + c * chunk_rows) if masked else None
            return acc + compute_chunk(pred_ref[pl.ds(r0, chunk_rows), :],
                                       targ_ref[pl.ds(r0, chunk_rows), :],
                                       row0)

        return lax.fori_loop(0, nchunks, body,
                             jnp.zeros((8, LANES), jnp.float32))

    def kernel(pred_ref, targ_ref, out_ref):
        if not needs_mask:
            out_ref[...] = block_partial(pred_ref, targ_ref, masked=False)
        else:
            last = grid0 - 1

            # Full blocks pay zero mask cost; only the last (ragged) block
            # runs the iota/compare/select path.
            @pl.when(pl.program_id(0) != last)
            def _():
                out_ref[...] = block_partial(pred_ref, targ_ref, masked=False)

            @pl.when(pl.program_id(0) == last)
            def _():
                out_ref[...] = block_partial(pred_ref, targ_ref, masked=True)

    return kernel


def weighted_smooth_l1_loss(input_preds, target_actuals, beta=1.0,
                            underprediction_penalty=2.0):
    assert input_preds.shape == target_actuals.shape
    n = int(input_preds.size)
    if n == 0:
        return jnp.float32(jnp.nan)  # matches torch mean() of an empty tensor

    # Flatten in native dtype (free); upcast happens inside the kernel.
    p_flat = jnp.ravel(input_preds)
    t_flat = jnp.ravel(target_actuals)

    # Lane-align only when necessary (padded zeros contribute exactly 0).
    pad = (-n) % LANES
    if pad:
        p_flat = jnp.pad(p_flat, (0, pad))
        t_flat = jnp.pad(t_flat, (0, pad))
    rows = (n + pad) // LANES
    p2 = p_flat.reshape(rows, LANES)
    t2 = t_flat.reshape(rows, LANES)

    if rows <= CHUNK_ROWS:
        # Tiny input: single full-extent block, single chunk.
        block_rows = rows
        chunk_rows = rows
        grid0 = 1
    else:
        # Keep >= 2 grid steps (both TensorCores on v7x), cap the block at
        # MAX_BLOCK_ROWS, and keep it a multiple of CHUNK_ROWS.
        half = (rows + 1) // 2
        block_rows = min(MAX_BLOCK_ROWS,
                         ((half + CHUNK_ROWS - 1) // CHUNK_ROWS) * CHUNK_ROWS)
        chunk_rows = CHUNK_ROWS
        grid0 = (rows + block_rows - 1) // block_rows

    kernel = _make_kernel(beta, underprediction_penalty, block_rows,
                          chunk_rows, rows, grid0)

    cost = pl.CostEstimate(
        flops=12 * n,
        transcendentals=0,
        bytes_accessed=2 * n * int(p2.dtype.itemsize) + 8 * grid0 * LANES * 4,
    )

    partials = pl.pallas_call(
        kernel,
        out_shape=jax.ShapeDtypeStruct((8, grid0 * LANES), jnp.float32),
        grid=(grid0,),
        in_specs=[
            pl.BlockSpec((block_rows, LANES), lambda i: (i, 0)),
            pl.BlockSpec((block_rows, LANES), lambda i: (i, 0)),
        ],
        out_specs=pl.BlockSpec((8, LANES), lambda i: (0, i)),
        compiler_params=pltpu.CompilerParams(
            dimension_semantics=("parallel",),
            vmem_limit_bytes=VMEM_LIMIT_BYTES,
        ),
        cost_estimate=cost,
    )(p2, t2)

    # Tiny final cross-block reduction + mean in the wrapper (keeps the grid
    # axis "parallel"; no cross-step serialization inside the kernel).
    return jnp.sum(partials) / n


def _reference(preds, targets, beta=1.0, penalty=2.0):
    p = preds.astype(jnp.float32)
    t = targets.astype(jnp.float32)
    diff = p - t
    ad = jnp.abs(diff)
    if beta > 0.0:
        loss = jnp.where(ad < beta, 0.5 * ad * ad / beta, ad - 0.5 * beta)
    else:
        loss = ad
    w = jnp.where(p < t, jnp.float32(penalty), jnp.float32(1.0))
    return jnp.mean(loss * w)


if __name__ == "__main__":
    key = jax.random.PRNGKey(0)
    k1, k2, k3, k4, k5, k6 = jax.random.split(key, 6)

    # 1) Small NCHW-style regression output (n % 128 == 0, single block).
    preds = jax.random.normal(k1, (2, 4, 16, 16), dtype=jnp.float32)
    targets = jax.random.normal(k2, (2, 4, 16, 16), dtype=jnp.float32)
    out = weighted_smooth_l1_loss(preds, targets, beta=1.0,
                                  underprediction_penalty=2.0)
    out = jax.block_until_ready(out)
    ref = _reference(preds, targets, beta=1.0, penalty=2.0)
    assert jnp.allclose(out, ref, atol=1e-5, rtol=1e-5), (out, ref)

    # 2) Ragged size: lane padding, 2-block grid, gated tail mask, fori chunks.
    preds2 = jax.random.normal(k3, (1025, 129), dtype=jnp.float32)
    targets2 = jax.random.normal(k4, (1025, 129), dtype=jnp.float32)
    out2 = weighted_smooth_l1_loss(preds2, targets2, beta=0.5,
                                   underprediction_penalty=3.0)
    out2 = jax.block_until_ready(out2)
    ref2 = _reference(preds2, targets2, beta=0.5, penalty=3.0)
    assert jnp.allclose(out2, ref2, atol=1e-5, rtol=1e-5), (out2, ref2)

    # 3) Aligned multi-block path (no mask), chunked fori_loop, 2 grid steps.
    preds3 = jax.random.normal(k5, (512, 256), dtype=jnp.float32)
    targets3 = jax.random.normal(k6, (512, 256), dtype=jnp.float32)
    out3 = weighted_smooth_l1_loss(preds3, targets3, beta=1.0,
                                   underprediction_penalty=2.0)
    out3 = jax.block_until_ready(out3)
    ref3 = _reference(preds3, targets3, beta=1.0, penalty=2.0)
    assert jnp.allclose(out3, ref3, atol=1e-5, rtol=1e-5), (out3, ref3)

    print("KERNEL_OK")
</pallas_src>

<mosaic_0001>
module attributes {stable_mosaic.version = 11 : i64} {
  func.func @kernel(%arg0: i32, %arg1: memref<16x128xf32, #tpu.memory_space<vmem>>, %arg2: memref<16x128xf32, #tpu.memory_space<vmem>>, %arg3: memref<8x128xf32, #tpu.memory_space<vmem>>) attributes {dimension_semantics = [#tpu.dimension_semantics<parallel>], iteration_bounds = array<i64: 1>, scalar_prefetch = 0 : i64, scratch_operands = 0 : i64, tpu.core_type = #tpu.core_type<tc>, window_params = [{transform_indices = @transform_0, window_bounds = array<i64: 16, 128>}, {transform_indices = @transform_1, window_bounds = array<i64: 16, 128>}, {transform_indices = @transform_2, window_bounds = array<i64: 8, 128>}]} {
    %c0 = arith.constant 0 : index
    %c0_0 = arith.constant 0 : index
    %0 = vector.load %arg1[%c0, %c0_0] : memref<16x128xf32, #tpu.memory_space<vmem>>, vector<16x128xf32>
    %c0_1 = arith.constant 0 : index
    %c0_2 = arith.constant 0 : index
    %1 = vector.load %arg2[%c0_1, %c0_2] : memref<16x128xf32, #tpu.memory_space<vmem>>, vector<16x128xf32>
    %2 = arith.subf %0, %1 : vector<16x128xf32>
    %3 = math.absf %2 : vector<16x128xf32>
    %cst = arith.constant 1.000000e+00 : f32
    %4 = vector.broadcast %cst : f32 to vector<16x128xf32>
    %5 = arith.cmpf olt, %3, %4 : vector<16x128xf32>
    %6 = arith.mulf %3, %3 : vector<16x128xf32>
    %cst_3 = arith.constant 5.000000e-01 : f32
    %7 = vector.broadcast %cst_3 : f32 to vector<16x128xf32>
    %8 = arith.mulf %6, %7 : vector<16x128xf32>
    %cst_4 = arith.constant 5.000000e-01 : f32
    %9 = vector.broadcast %cst_4 : f32 to vector<16x128xf32>
    %10 = arith.subf %3, %9 : vector<16x128xf32>
    %11 = arith.select %5, %8, %10 : vector<16x128xi1>, vector<16x128xf32>
    %cst_5 = arith.constant 0.000000e+00 : f32
    %12 = vector.broadcast %cst_5 : f32 to vector<16x128xf32>
    %13 = arith.cmpf olt, %2, %12 : vector<16x128xf32>
    %cst_6 = arith.constant 2.000000e+00 : f32
    %cst_7 = arith.constant 1.000000e+00 : f32
    %14 = vector.broadcast %cst_6 : f32 to vector<16x128xf32>
    %15 = vector.broadcast %cst_7 : f32 to vector<16x128xf32>
    %16 = arith.select %13, %14, %15 : vector<16x128xi1>, vector<16x128xf32>
    %17 = arith.mulf %11, %16 : vector<16x128xf32>
    %18 = vector.extract_strided_slice %17 {offsets = [0, 0], sizes = [8, 128], strides = [1, 1]} : vector<16x128xf32> to vector<8x128xf32>
    %19 = vector.extract_strided_slice %17 {offsets = [8, 0], sizes = [8, 128], strides = [1, 1]} : vector<16x128xf32> to vector<8x128xf32>
    %20 = arith.addf %18, %19 : vector<8x128xf32>
    %c0_8 = arith.constant 0 : index
    %c0_9 = arith.constant 0 : index
    %21 = vector.load %arg3[%c0_8, %c0_9] : memref<8x128xf32, #tpu.memory_space<vmem>>, vector<8x128xf32>
    tpu.vector_store %arg3[%c0_8, %c0_9], %20 {strides = array<i32>} : memref<8x128xf32, #tpu.memory_space<vmem>>, vector<8x128xf32>,
    return
  }
  func.func @transform_0(%arg0: i32) -> (i32, i32) {
    %c0_i32 = arith.constant 0 : i32
    %c0_i32_0 = arith.constant 0 : i32
    return %arg0, %c0_i32 : i32, i32
  }
  func.func @transform_1(%arg0: i32) -> (i32, i32) {
    %c0_i32 = arith.constant 0 : i32
    %c0_i32_0 = arith.constant 0 : i32
    return %arg0, %c0_i32 : i32, i32
  }
  func.func @transform_2(%arg0: i32) -> (i32, i32) {
    %c0_i32 = arith.constant 0 : i32
    %c0_i32_0 = arith.constant 0 : i32
    return %c0_i32, %arg0 : i32, i32
  }
}

</mosaic_0001>

<llo_original>
// kernel: tpu_custom_call.1
$region0: #{tpu_custom_call.1}
  #allocation0 [shape = 'u32[]', space=smem, size = 0x4, offset = 0x4, fixed_abs, tag = 'smem constant byte address 0x4 - core index']
  #allocation1 [shape = 'u32[144,128]{1,0:T(1,128)}', space=vmem, size = 0x12000, scoped, tag = 'internal scratch']
  %s0 = inlined_call_operand.hbm [shape: f32[16,128], index: 0, kind: input, shape index: {}]
  %s1 = inlined_call_operand.hbm [shape: f32[16,128], index: 1, kind: input, shape index: {}]
  %s2 = inlined_call_operand.hbm [shape: f32[8,128], index: 2, kind: output, shape index: {}]
  %s3 = sld [smem:[#allocation0]]
  $region26: #{tpu_custom_call.1} parent=0
    _
  %s5 = ssub.s32 1, %s3
  %s6 = scalar_select 0, %s5, %s3
  $region1: #{tpu_custom_call.1} parent=0
    #allocation2 [shape = 'u8[8192]{0}', space=vmem, size = 0x2000, scoped, tag = 'input window, operand 0, single buffered']
    #allocation3 [shape = 's32[1]{0}', space=sflag, size = 0x4, scoped, tag = 'scoped memory for tpu_custom_call.1']
    #allocation4 [shape = 's32[1]{0}', space=sflag, size = 0x4, scoped, tag = 'scoped memory for tpu_custom_call.1']
    #allocation5 [shape = 'u8[8192]{0}', space=vmem, size = 0x2000, scoped, tag = 'input window, operand 1, single buffered']
    #allocation6 [shape = 's32[1]{0}', space=sflag, size = 0x4, scoped, tag = 'scoped memory for tpu_custom_call.1']
    #allocation7 [shape = 'u8[4096]{0}', space=vmem, size = 0x1000, scoped, tag = 'output window, operand 0, single buffered']
    %7 = vsyncpa [#allocation3], 0
    %8 = vsyncpa [#allocation6], 0
    %9 = vsyncpa [#allocation4], 0
    // Predicated region
    $region2: #{tpu_custom_call.1} parent=1 // pred_check
      _
    $region3: #{tpu_custom_call.1} parent=1 // pred_check_branch
      %11 = sbr.rel (0) target = $region5
    $region4: #{tpu_custom_call.1} parent=1 // pred_region
      %s13 = ssub.s32 256, 256
      %14 = vsyncadd [#allocation3], %s13
      %s15 = sshll.u32 [#allocation2], 4
      %s16 = int_to_ptr.vmem [resolvable:$true] %s15
      %21 = dma.hbm_to_vmem [thread:$0]  %s0, 256, %s16, [#allocation3], 128, 128, 8
    $region5: #{tpu_custom_call.1} parent=1 // pred_fallthru
      _
    // Predicated region
    $region6: #{tpu_custom_call.1} parent=1 // pred_check
      _
    $region7: #{tpu_custom_call.1} parent=1 // pred_check_branch
      %23 = sbr.rel (0) target = $region9
    $region8: #{tpu_custom_call.1} parent=1 // pred_region
      %s25 = ssub.s32 256, 256
      %26 = vsyncadd [#allocation6], %s25
      %s27 = sshll.u32 [#allocation5], 4
      %s28 = int_to_ptr.vmem [resolvable:$true] %s27
      %33 = dma.hbm_to_vmem [thread:$0]  %s1, 256, %s28, [#allocation6], 128, 128, 8
    $region9: #{tpu_custom_call.1} parent=1 // pred_fallthru
      _
    // Predicated region
    $region10: #{tpu_custom_call.1} parent=1 // pred_check
      _
    $region11: #{tpu_custom_call.1} parent=1 // pred_check_branch
      %35 = sbr.rel (0) target = $region13
    $region12: #{tpu_custom_call.1} parent=1 // pred_region
      %36 = dma.done [#allocation3], 256
    $region13: #{tpu_custom_call.1} parent=1 // pred_fallthru
      _
    // Predicated region
    $region14: #{tpu_custom_call.1} parent=1 // pred_check
      _
    $region15: #{tpu_custom_call.1} parent=1 // pred_check_branch
      %38 = sbr.rel (0) target = $region17
    $region16: #{tpu_custom_call.1} parent=1 // pred_region
      %39 = dma.done [#allocation6], 256
    $region17: #{tpu_custom_call.1} parent=1 // pred_fallthru
      _
    %v40 = vld [vmem:[#allocation2] sm:$0xff]
    %v41 = vld [vmem:[#allocation2 + $0x8] sm:$0xff]
    %v42 = vld [vmem:[#allocation5] sm:$0xff]
    %v43 = vld [vmem:[#allocation5 + $0x8] sm:$0xff]
    %v44 = vsub.f32 %v40, %v42
    %v45 = vsub.f32 %v41, %v43
    %v46 = vand.u32 2147483647, %v44
    %v47 = vand.u32 2147483647, %v45
    %vm48 = vcmp.lt.f32.partialorder %v46, 1.0
    %vm49 = vcmp.lt.f32.partialorder %v47, 1.0
    %v50 = vmul.f32 %v46, %v46
    %v51 = vmul.f32 %v47, %v47
    %v52 = vmul.f32 %v50, 0.5
    %v53 = vmul.f32 %v51, 0.5
    %v54 = vsub.f32 %v46, 0.5
    %v55 = vsub.f32 %v47, 0.5
    %v56 = vsel %vm48, %v52, %v54
    %v57 = vsel %vm49, %v53, %v55
    %vm58 = vcmp.lt.f32.partialorder %v44, 0.0
    %vm59 = vcmp.lt.f32.partialorder %v45, 0.0
    %v60 = vsel %vm58, 2.0, 1.0
    %v61 = vsel %vm59, 2.0, 1.0
    %v62 = vmul.f32 %v56, %v60
    %v63 = vmul.f32 %v57, %v61
    %v64 = vadd.f32 %v62, %v63
    %65 = vst [vmem:[#allocation7] sm:$0xff] %v64
    // Predicated region
    $region18: #{tpu_custom_call.1} parent=1 // pred_check
      _
    $region19: #{tpu_custom_call.1} parent=1 // pred_check_branch
      %67 = sbr.rel (0) target = $region21
    $region20: #{tpu_custom_call.1} parent=1 // pred_region
      %s69 = ssub.s32 128, 128
      %70 = vsyncadd [#allocation4], %s69
      %s72 = sshll.u32 [#allocation7], 4
      %s73 = int_to_ptr.vmem [resolvable:$true] %s72
      %75 = dma.vmem_to_hbm [thread:$0]  %s73, 128, %s2, [#allocation4]
    $region21: #{tpu_custom_call.1} parent=1 // pred_fallthru
      _
    // Predicated region
    $region22: #{tpu_custom_call.1} parent=1 // pred_check
      _
    $region23: #{tpu_custom_call.1} parent=1 // pred_check_branch
      %77 = sbr.rel (0) target = $region25
    $region24: #{tpu_custom_call.1} parent=1 // pred_region
      %78 = dma.done [#allocation4], 128
    $region25: #{tpu_custom_call.1} parent=1 // pred_fallthru
      _
    %79 = vsyncpa [#allocation3], 1
    %80 = vsyncpa [#allocation6], 1
    %81 = vsyncpa [#allocation4], 1

</llo_original>
